<compile_context>
chip_gen: v7x
topology: tpu7x:2x2x1
jax: 0.10.0
libtpu: 0.0.40
codegen_flags: <defaults>
</compile_context>

<pallas_src>
import functools

import jax
import jax.numpy as jnp
from jax import lax
from jax.experimental import pallas as pl
from jax.experimental.pallas import tpu as pltpu

IN_DIM = 4                 # state features
HIDDEN = 16                # layer1 width
N_ACTIONS = 2              # advantage head width
HEAD_OUT = 1 + N_ACTIONS   # fused head rows: [state_value | adv_0 | adv_1]
HEAD_PAD = 8               # head rows padded to a full sublane group (rows 3:8 zero)

LANES = 128
TB_MAX = 32768             # batch rows per grid step (lane-dense => ~48 B/row VMEM).
VMEM_LIMIT = 32 * 1024 * 1024

# Packed parameter slab, shape (HIDDEN, P_COLS) f32, everything pre-transposed:
#   [:, COL_W1:COL_W1+4]        W1^T                  (16, 4)
#   [:, COL_B1:COL_B1+1]        b1 as a column        (16, 1)
#   [0:8, COL_WH:COL_WH+16]     W_head^T = [Wv|Wa]^T  (3, 16) zero-padded to 8 rows
#   [0:8, COL_BH:COL_BH+1]      b_head^T = [bv|ba]^T  (3, 1)  zero-padded to 8 rows
COL_W1 = 0
COL_B1 = IN_DIM
COL_WH = 8
COL_BH = COL_WH + HIDDEN
P_COLS = COL_BH + 1        # = 25 (tiny slab, single DMA, VMEM-resident)


def _forward_tile(xt, p_ref):
    """Shared per-tile compute. xt: (IN_DIM, TB) -> (svt (1,TB), advt (2,TB)) f32."""
    w1t = p_ref[:, COL_W1:COL_W1 + IN_DIM]            # (16, 4)
    b1c = p_ref[:, COL_B1:COL_B1 + 1]                 # (16, 1)
    wht = p_ref[0:HEAD_PAD, COL_WH:COL_WH + HIDDEN]   # (8, 16), rows 3:8 zero
    bhc = p_ref[0:HEAD_PAD, COL_BH:COL_BH + 1]        # (8, 1),  rows 3:8 zero

    ht = jnp.maximum(
        jnp.dot(w1t, xt, preferred_element_type=jnp.float32) + b1c, 0.0)   # (16, TB)
    yt = jnp.dot(wht, ht, preferred_element_type=jnp.float32) + bhc        # (8, TB)
    svt = yt[0:1, :]                   # (1, TB) state value
    advt = yt[1:1 + N_ACTIONS, :]      # (2, TB) action advantages
    return svt, advt


def _dueling_q_single_kernel(xt_ref, p_ref, qt_ref, *, inv_count):
    """Fast path: whole batch in one tile -> compute the global mean in-kernel."""
    svt, advt = _forward_tile(xt_ref[...], p_ref)
    adv_sum = jnp.sum(jnp.sum(advt, axis=1, keepdims=True), axis=0, keepdims=True)
    qt_ref[...] = svt + (advt - adv_sum * inv_count)


def _dueling_q_tiled_kernel(xt_ref, p_ref, qt_ref, psum_ref, *, tb, true_b, mask_cols):
    """Heavy pass: write unnormalized q^T and a per-tile adv partial sum."""
    svt, advt = _forward_tile(xt_ref[...], p_ref)
    qt_ref[...] = svt + advt           # global scalar mean subtracted in the epilogue

    contrib = advt
    if mask_cols:
        # Zero out padded batch columns so they do not pollute the global mean.
        col = lax.broadcasted_iota(jnp.int32, advt.shape, 1) + pl.program_id(0) * tb
        contrib = jnp.where(col < true_b, advt, 0.0)
    part = jnp.sum(jnp.sum(contrib, axis=1, keepdims=True), axis=0, keepdims=True)
    psum_ref[...] = jnp.broadcast_to(part, psum_ref.shape)   # lane-dense (1,128) block


def pack_params(w1, b1, wv, bv, wa, ba):
    """Fuse the two heads and pack all parameters (pre-transposed) into one slab."""
    p = jnp.zeros((HIDDEN, P_COLS), jnp.float32)
    p = p.at[:, COL_W1:COL_W1 + IN_DIM].set(w1.T.astype(jnp.float32))
    p = p.at[:, COL_B1:COL_B1 + 1].set(b1.T.astype(jnp.float32))
    wht = jnp.concatenate([wv, wa], axis=1).T.astype(jnp.float32)   # (3, 16)
    bht = jnp.concatenate([bv, ba], axis=1).T.astype(jnp.float32)   # (3, 1)
    p = p.at[0:HEAD_OUT, COL_WH:COL_WH + HIDDEN].set(wht)
    p = p.at[0:HEAD_OUT, COL_BH:COL_BH + 1].set(bht)
    return p


def _cost_estimate(rows):
    flops = 2 * rows * (IN_DIM * HIDDEN + HIDDEN * HEAD_PAD)
    bytes_accessed = rows * 4 * (IN_DIM + N_ACTIONS) + HIDDEN * P_COLS * 4
    return pl.CostEstimate(flops=flops, transcendentals=0,
                           bytes_accessed=bytes_accessed)


@functools.partial(jax.jit, static_argnames=("tb_max",))
def dueling_q_forward_packed(x, params, *, tb_max=TB_MAX):
    x = x.astype(jnp.float32)
    B = x.shape[0]
    xt = x.T      # (IN_DIM, B): batch on lanes -> lane-dense loads/stores in the kernel

    if B <= tb_max:
        # Single-tile fast path: one grid step, no padding, no epilogue pass.
        # Block == full array dims, so B need not be a multiple of 128.
        qt = pl.pallas_call(
            functools.partial(_dueling_q_single_kernel,
                              inv_count=1.0 / float(B * N_ACTIONS)),
            out_shape=jax.ShapeDtypeStruct((N_ACTIONS, B), jnp.float32),
            grid_spec=pltpu.PrefetchScalarGridSpec(
                num_scalar_prefetch=0,
                grid=(1,),
                in_specs=[pl.BlockSpec((IN_DIM, B), lambda i: (0, 0)),
                          pl.BlockSpec((HIDDEN, P_COLS), lambda i: (0, 0))],
                out_specs=pl.BlockSpec((N_ACTIONS, B), lambda i: (0, 0)),
            ),
            compiler_params=pltpu.CompilerParams(
                dimension_semantics=("arbitrary",),
                vmem_limit_bytes=VMEM_LIMIT),
            cost_estimate=_cost_estimate(B),
        )(xt, params)
        return qt.T

    # Multi-tile path: pad the batch (lane) axis to a multiple of TB; padded columns
    # are masked out of the mean and sliced off at the end.
    tb = tb_max
    b_pad = pl.cdiv(B, tb) * tb
    n_tiles = b_pad // tb
    xt_p = jnp.pad(xt, ((0, 0), (0, b_pad - B)))

    kernel = functools.partial(_dueling_q_tiled_kernel, tb=tb, true_b=B,
                               mask_cols=(b_pad != B))
    qt_unnorm, psums = pl.pallas_call(
        kernel,
        out_shape=(jax.ShapeDtypeStruct((N_ACTIONS, b_pad), jnp.float32),
                   jax.ShapeDtypeStruct((1, n_tiles * LANES), jnp.float32)),
        grid_spec=pltpu.PrefetchScalarGridSpec(
            num_scalar_prefetch=0,
            grid=(n_tiles,),
            in_specs=[pl.BlockSpec((IN_DIM, tb), lambda i: (0, i)),
                      # constant index_map -> parameter slab loaded once, VMEM-resident
                      pl.BlockSpec((HIDDEN, P_COLS), lambda i: (0, 0))],
            out_specs=[pl.BlockSpec((N_ACTIONS, tb), lambda i: (0, i)),
                       pl.BlockSpec((1, LANES), lambda i: (0, i))],
        ),
        # No cross-tile accumulator -> the batch axis is safely "parallel" (v7x megacore).
        compiler_params=pltpu.CompilerParams(
            dimension_semantics=("parallel",),
            vmem_limit_bytes=VMEM_LIMIT),
        cost_estimate=_cost_estimate(b_pad),
    )(xt_p, params)

    adv_sum = jnp.sum(psums.reshape(n_tiles, LANES)[:, 0])
    adv_mean = adv_sum / float(B * N_ACTIONS)
    # Tiny epilogue: XLA fuses the slice + scalar subtract + transpose into one pass.
    return (qt_unnorm[:, :B] - adv_mean).T


def dueling_q_forward(x, w1, b1, wv, bv, wa, ba, *, tb_max=TB_MAX):
    # NOTE: in a real training loop, call pack_params once outside the step.
    return dueling_q_forward_packed(x, pack_params(w1, b1, wv, bv, wa, ba),
                                    tb_max=tb_max)


def init_params(key):
    """Deterministic init mimicking PyTorch's default Linear init
    (uniform(-1/sqrt(fan_in), 1/sqrt(fan_in))). Weights stored (in, out)."""
    def linear(key, fan_in, fan_out):
        kw, kb = jax.random.split(key)
        bound = 1.0 / (fan_in ** 0.5)
        w = jax.random.uniform(kw, (fan_in, fan_out), jnp.float32, -bound, bound)
        b = jax.random.uniform(kb, (1, fan_out), jnp.float32, -bound, bound)
        return w, b

    k1, k2, k3 = jax.random.split(key, 3)
    w1, b1 = linear(k1, IN_DIM, HIDDEN)     # layer1: Linear(4, 16)
    wv, bv = linear(k2, HIDDEN, 1)          # state_value_layer: Linear(16, 1)
    wa, ba = linear(k3, HIDDEN, N_ACTIONS)  # action_advantage_layer: Linear(16, 2)
    return w1, b1, wv, bv, wa, ba


def reference_forward(x, w1, b1, wv, bv, wa, ba):
    h = jax.nn.relu(x @ w1 + b1)
    sv = h @ wv + bv
    adv = h @ wa + ba
    return sv + (adv - jnp.mean(adv))   # torch.mean with no dim -> global scalar mean


# TODO(synk): optimizer / MSELoss / train() are training-time concerns, not part of the
# forward pass; only forward() is implemented as a kernel.

if __name__ == "__main__":
    key = jax.random.PRNGKey(0)
    k_params, k_x, k_x2 = jax.random.split(key, 3)

    params = init_params(k_params)

    # Small input consistent with the module: batch=2, 4 state features (fast path).
    x = jax.random.normal(k_x, (2, IN_DIM), dtype=jnp.float32)
    q = jax.block_until_ready(dueling_q_forward(x, *params))
    q_ref = reference_forward(x, *params)
    assert q.shape == (2, N_ACTIONS)
    assert jnp.allclose(q, q_ref, atol=1e-5, rtol=1e-5)

    # Also exercise the multi-tile ("parallel" batch) path with a tiny tile size.
    x2 = jax.random.normal(k_x2, (300, IN_DIM), dtype=jnp.float32)
    q2 = jax.block_until_ready(dueling_q_forward(x2, *params, tb_max=128))
    q2_ref = reference_forward(x2, *params)
    assert q2.shape == (300, N_ACTIONS)
    assert jnp.allclose(q2, q2_ref, atol=1e-4, rtol=1e-4)

    print("KERNEL_OK")
</pallas_src>

<mosaic_0001>
module attributes {stable_mosaic.version = 11 : i64} {
  func.func @_dueling_q_single_kernel(%arg0: i32, %arg1: memref<4x2xf32, #tpu.memory_space<vmem>>, %arg2: memref<16x25xf32, #tpu.memory_space<vmem>>, %arg3: memref<2x2xf32, #tpu.memory_space<vmem>>) attributes {dimension_semantics = [#tpu.dimension_semantics<arbitrary>], iteration_bounds = array<i64: 1>, scalar_prefetch = 0 : i64, scratch_operands = 0 : i64, tpu.core_type = #tpu.core_type<tc>, window_params = [{pipeline_mode = #tpu.pipeline_mode<synchronous>, transform_indices = @transform_0, window_bounds = array<i64: 4, 2>}, {pipeline_mode = #tpu.pipeline_mode<synchronous>, transform_indices = @transform_1, window_bounds = array<i64: 16, 25>}, {pipeline_mode = #tpu.pipeline_mode<synchronous>, transform_indices = @transform_2, window_bounds = array<i64: 2, 2>}]} {
    %c0 = arith.constant 0 : index
    %c0_0 = arith.constant 0 : index
    %0 = vector.load %arg1[%c0, %c0_0] : memref<4x2xf32, #tpu.memory_space<vmem>>, vector<4x2xf32>
    %c0_1 = arith.constant 0 : index
    %c0_2 = arith.constant 0 : index
    %1 = vector.load %arg2[%c0_1, %c0_2] : memref<16x25xf32, #tpu.memory_space<vmem>>, vector<16x4xf32>
    %c0_3 = arith.constant 0 : index
    %c4 = arith.constant 4 : index
    %2 = vector.load %arg2[%c0_3, %c4] : memref<16x25xf32, #tpu.memory_space<vmem>>, vector<16x1xf32>
    %c0_4 = arith.constant 0 : index
    %c8 = arith.constant 8 : index
    %3 = vector.load %arg2[%c0_4, %c8] : memref<16x25xf32, #tpu.memory_space<vmem>>, vector<8x16xf32>
    %c0_5 = arith.constant 0 : index
    %c24 = arith.constant 24 : index
    %4 = vector.load %arg2[%c0_5, %c24] : memref<16x25xf32, #tpu.memory_space<vmem>>, vector<8x1xf32>
    %cst = arith.constant dense<0.000000e+00> : vector<16x2xf32>
    %5 = tpu.matmul %1, %0, %cst {dimension_numbers = #tpu.dot_dimension_numbers<[1], [0], [0], [1], [0, 0, 1, 1], [], []>} : vector<16x4xf32>, vector<4x2xf32>, vector<16x2xf32> -> vector<16x2xf32>
    %6 = vector.broadcast %2 : vector<16x1xf32> to vector<16x2xf32>
    %7 = arith.addf %5, %6 : vector<16x2xf32>
    %cst_6 = arith.constant 0.000000e+00 : f32
    %8 = vector.broadcast %cst_6 : f32 to vector<16x2xf32>
    %9 = arith.maximumf %7, %8 : vector<16x2xf32>
    %cst_7 = arith.constant dense<0.000000e+00> : vector<8x2xf32>
    %10 = tpu.matmul %3, %9, %cst_7 {dimension_numbers = #tpu.dot_dimension_numbers<[1], [0], [0], [1], [0, 0, 1, 1], [], []>} : vector<8x16xf32>, vector<16x2xf32>, vector<8x2xf32> -> vector<8x2xf32>
    %11 = vector.broadcast %4 : vector<8x1xf32> to vector<8x2xf32>
    %12 = arith.addf %10, %11 : vector<8x2xf32>
    %13 = vector.extract_strided_slice %12 {offsets = [0, 0], sizes = [1, 2], strides = [1, 1]} : vector<8x2xf32> to vector<1x2xf32>
    %14 = vector.extract_strided_slice %12 {offsets = [1, 0], sizes = [2, 2], strides = [1, 1]} : vector<8x2xf32> to vector<2x2xf32>
    %cst_8 = arith.constant dense<0.000000e+00> : vector<2xf32>
    %15 = vector.multi_reduction <add>, %14, %cst_8 [1] : vector<2x2xf32> to vector<2xf32>
    %16 = vector.shape_cast %15 : vector<2xf32> to vector<2x1xf32>
    %cst_9 = arith.constant dense<0.000000e+00> : vector<1xf32>
    %17 = vector.multi_reduction <add>, %16, %cst_9 [0] : vector<2x1xf32> to vector<1xf32>
    %18 = vector.shape_cast %17 : vector<1xf32> to vector<1x1xf32>
    %cst_10 = arith.constant 2.500000e-01 : f32
    %19 = vector.broadcast %cst_10 : f32 to vector<1x1xf32>
    %20 = arith.mulf %18, %19 : vector<1x1xf32>
    %21 = vector.broadcast %20 : vector<1x1xf32> to vector<2x2xf32>
    %22 = arith.subf %14, %21 : vector<2x2xf32>
    %23 = vector.broadcast %13 : vector<1x2xf32> to vector<2x2xf32>
    %24 = arith.addf %23, %22 : vector<2x2xf32>
    %c0_11 = arith.constant 0 : index
    %c0_12 = arith.constant 0 : index
    %25 = vector.load %arg3[%c0_11, %c0_12] : memref<2x2xf32, #tpu.memory_space<vmem>>, vector<2x2xf32>
    tpu.vector_store %arg3[%c0_11, %c0_12], %24 {strides = array<i32>} : memref<2x2xf32, #tpu.memory_space<vmem>>, vector<2x2xf32>,
    return
  }
  func.func @transform_0(%arg0: i32) -> (i32, i32) {
    %c0_i32 = arith.constant 0 : i32
    %c0_i32_0 = arith.constant 0 : i32
    %c0_i32_1 = arith.constant 0 : i32
    return %c0_i32, %c0_i32_0 : i32, i32
  }
  func.func @transform_1(%arg0: i32) -> (i32, i32) {
    %c0_i32 = arith.constant 0 : i32
    %c0_i32_0 = arith.constant 0 : i32
    %c0_i32_1 = arith.constant 0 : i32
    return %c0_i32, %c0_i32_0 : i32, i32
  }
  func.func @transform_2(%arg0: i32) -> (i32, i32) {
    %c0_i32 = arith.constant 0 : i32
    %c0_i32_0 = arith.constant 0 : i32
    %c0_i32_1 = arith.constant 0 : i32
    return %c0_i32, %c0_i32_0 : i32, i32
  }
}

</mosaic_0001>

<llo_original>
// kernel: dueling_q_forward_packed.1
$region0: #{dueling_q_forward_packed.1}
  #allocation0 [shape = 'u32[]', space=smem, size = 0x4, offset = 0x4, fixed_abs, tag = 'smem constant byte address 0x4 - core index']
  #allocation1 [shape = 'u32[144,128]{1,0:T(1,128)}', space=vmem, size = 0x12000, scoped, tag = 'internal scratch']
  %s0 = inlined_call_operand.vmem [shape: f32[4,2], index: 0, kind: input, shape index: {}]
  %s1 = inlined_call_operand.hbm [shape: f32[16,25], index: 1, kind: input, shape index: {}]
  %s2 = inlined_call_operand.vmem [shape: f32[2,2], index: 2, kind: output, shape index: {}]
  %s3 = sld [smem:[#allocation0]]
  $region22: #{dueling_q_forward_packed.1} parent=0
    _
  %s5 = ssub.s32 1, %s3
  %s6 = scalar_select 0, %s5, %s3
  $region1: #{dueling_q_forward_packed.1} parent=0
    #allocation2 [shape = 'u8[8192]{0}', space=vmem, size = 0x2000, scoped, tag = 'input window, operand 1, single buffered']
    #allocation3 [shape = 's32[1]{0}', space=sflag, size = 0x4, scoped, tag = 'scoped memory for dueling_q_forward_packed.1']
    %7 = vsyncpa [#allocation3], 0
    // Predicated region
    $region2: #{dueling_q_forward_packed.1} parent=1 // pred_check
      _
    $region3: #{dueling_q_forward_packed.1} parent=1 // pred_check_branch
      %9 = sbr.rel (0) target = $region5
    $region4: #{dueling_q_forward_packed.1} parent=1 // pred_region
      _
    $region5: #{dueling_q_forward_packed.1} parent=1 // pred_fallthru
      _
    // Predicated region
    $region6: #{dueling_q_forward_packed.1} parent=1 // pred_check
      _
    $region7: #{dueling_q_forward_packed.1} parent=1 // pred_check_branch
      %11 = sbr.rel (0) target = $region9
    $region8: #{dueling_q_forward_packed.1} parent=1 // pred_region
      %s13 = ssub.s32 256, 256
      %14 = vsyncadd [#allocation3], %s13
      %s15 = sshll.u32 [#allocation2], 4
      %s16 = int_to_ptr.vmem [resolvable:$true] %s15
      %21 = dma.hbm_to_vmem [thread:$0]  %s1, 256, %s16, [#allocation3], 128, 128, 8
    $region9: #{dueling_q_forward_packed.1} parent=1 // pred_fallthru
      _
    // Predicated region
    $region10: #{dueling_q_forward_packed.1} parent=1 // pred_check
      _
    $region11: #{dueling_q_forward_packed.1} parent=1 // pred_check_branch
      %23 = sbr.rel (0) target = $region13
    $region12: #{dueling_q_forward_packed.1} parent=1 // pred_region
      %24 = dma.done [#allocation3], 256
    $region13: #{dueling_q_forward_packed.1} parent=1 // pred_fallthru
      _
    %v25 = vld [vmem:[%s0] sm:$0xf]
    %v26 = vld [vmem:[#allocation2] sm:$0xff]
    %v27 = vld [vmem:[#allocation2 + $0x8] sm:$0xff]
    %29 = vset.pattern.permute.xlu0 4
    %30 = vperm.xlu0 %29, %v26
    %v31 = vpop.permute.xlu0 %30
    %34 = vset.pattern.permute.xlu0 4
    %35 = vperm.xlu0 %34, %v27
    %v36 = vpop.permute.xlu0 %35
    %vm38 = vcmask 31744
    %v39 = vsel %vm38, %v26, 0
    %v41 = vsel %vm38, %v27, 0
    %vm43 = vcmask 1043456
    %v45 = vsel %vm43, %v25, 0
    %47 = vmatprep.subr.mxu0 0.0
    %48 = vmatpush1.msra.mxu0 %v45
    %49 = vmatprep.subr.mxu0 0.0
    %50 = vmatpush1.msra.mxu0 0.0
    %51 = vmatprep.subr.mxu0 0.0
    %52 = vmatpush1.msra.mxu0 0.0
    %53 = vmatprep.subr.mxu0 0.0
    %54 = vmatpush1.msra.mxu0 0.0
    %55 = vmatprep.subr.mxu0 0.0
    %56 = vmatpush1.msra.mxu0 0.0
    %57 = vmatprep.subr.mxu0 0.0
    %58 = vmatpush1.msra.mxu0 0.0
    %59 = vmatprep.subr.mxu0 0.0
    %60 = vmatpush1.msra.mxu0 0.0
    %61 = vmatprep.subr.mxu0 0.0
    %62 = vmatpush1.msra.mxu0 0.0
    %63 = vmatprep.subr.mxu0 0.0
    %64 = vmatpush1.msra.mxu0 0.0
    %65 = vmatprep.subr.mxu0 0.0
    %66 = vmatpush1.msra.mxu0 0.0
    %67 = vmatprep.subr.mxu0 0.0
    %68 = vmatpush1.msra.mxu0 0.0
    %69 = vmatprep.subr.mxu0 0.0
    %70 = vmatpush1.msra.mxu0 0.0
    %71 = vmatprep.subr.mxu0 0.0
    %72 = vmatpush1.msra.mxu0 0.0
    %73 = vmatprep.subr.mxu0 0.0
    %74 = vmatpush1.msra.mxu0 0.0
    %75 = vmatprep.subr.mxu0 0.0
    %76 = vmatpush1.msra.mxu0 0.0
    %77 = vmatprep.subr.mxu0 0.0
    %78 = vmatpush1.msra.mxu0 0.0
    %79 = vmatprep.subr.mxu0 0.0
    %80 = vmatpush1.msra.mxu0 0.0
    %81 = vmatprep.subr.mxu0 0.0
    %82 = vmatpush1.msra.mxu0 0.0
    %83 = vmatprep.subr.mxu0 0.0
    %84 = vmatpush1.msra.mxu0 0.0
    %85 = vmatprep.subr.mxu0 0.0
    %86 = vmatpush1.msra.mxu0 0.0
    %87 = vmatprep.subr.mxu0 0.0
    %88 = vmatpush1.msra.mxu0 0.0
    %89 = vmatprep.subr.mxu0 0.0
    %90 = vmatpush1.msra.mxu0 0.0
    %91 = vmatprep.subr.mxu0 0.0
    %92 = vmatpush1.msra.mxu0 0.0
    %93 = vmatprep.subr.mxu0 0.0
    %94 = vmatpush1.msra.mxu0 0.0
    %95 = vmatprep.subr.mxu0 0.0
    %96 = vmatpush1.msra.mxu0 0.0
    %97 = vmatprep.subr.mxu0 0.0
    %98 = vmatpush1.msra.mxu0 0.0
    %99 = vmatprep.subr.mxu0 0.0
    %100 = vmatpush1.msra.mxu0 0.0
    %101 = vmatprep.subr.mxu0 0.0
    %102 = vmatpush1.msra.mxu0 0.0
    %103 = vmatprep.subr.mxu0 0.0
    %104 = vmatpush1.msra.mxu0 0.0
    %105 = vmatprep.subr.mxu0 0.0
    %106 = vmatpush1.msra.mxu0 0.0
    %107 = vmatprep.subr.mxu0 0.0
    %108 = vmatpush1.msra.mxu0 0.0
    %109 = vmatprep.subr.mxu0 0.0
    %110 = vmatpush1.msra.mxu0 0.0
    %111 = vmatprep.mubr.f32.mxu0 0.0
    %112 = vmatmul.mubr.f32.gmra.mrb[0].mxu0 %v39
    %v113 = vpop.f32.mrb[0].mxu0
    %v114 = vadd.f32 %v31, %v113
    %v115 = vpop.f32.mrb[0].mxu0
    %116 = vmatprep.mubr.f32.mxu0 0.0
    %117 = vmatmul.mubr.f32.gmra.mrb[0].mxu0 %v41
    %v118 = vpop.f32.mrb[0].mxu0
    %v119 = vadd.f32 %v36, %v118
    %v120 = vpop.f32.mrb[0].mxu0
    %121 = vdwg.mxu0
    %v122 = vmax.f32 %v114, 0.0
    %v123 = vmax.f32 %v119, 0.0
    %124 = vset.pattern.permute.xlu0 24
    %125 = vperm.xlu0 %124, %v26
    %v126 = vpop.permute.xlu0 %125
    %128 = vrot.lane.b32.xlu0 %v26, 120
    %v129 = vpop.permute.xlu0 %128
    %vm130 = vcmask 130048
    %v131 = vsel %vm130, %v129, 0
    %133 = vmatprep.subr.mxu0 0.0
    %134 = vmatpush1.msra.mxu0 %v122
    %135 = vmatprep.subr.mxu0 0.0
    %136 = vmatpush1.msra.mxu0 %v123
    %137 = vmatprep.subr.mxu0 0.0
    %138 = vmatpush1.msra.mxu0 0.0
    %139 = vmatprep.subr.mxu0 0.0
    %140 = vmatpush1.msra.mxu0 0.0
    %141 = vmatprep.subr.mxu0 0.0
    %142 = vmatpush1.msra.mxu0 0.0
    %143 = vmatprep.subr.mxu0 0.0
    %144 = vmatpush1.msra.mxu0 0.0
    %145 = vmatprep.subr.mxu0 0.0
    %146 = vmatpush1.msra.mxu0 0.0
    %147 = vmatprep.subr.mxu0 0.0
    %148 = vmatpush1.msra.mxu0 0.0
    %149 = vmatprep.subr.mxu0 0.0
    %150 = vmatpush1.msra.mxu0 0.0
    %151 = vmatprep.subr.mxu0 0.0
    %152 = vmatpush1.msra.mxu0 0.0
    %153 = vmatprep.subr.mxu0 0.0
    %154 = vmatpush1.msra.mxu0 0.0
    %155 = vmatprep.subr.mxu0 0.0
    %156 = vmatpush1.msra.mxu0 0.0
    %157 = vmatprep.subr.mxu0 0.0
    %158 = vmatpush1.msra.mxu0 0.0
    %159 = vmatprep.subr.mxu0 0.0
    %160 = vmatpush1.msra.mxu0 0.0
    %161 = vmatprep.subr.mxu0 0.0
    %162 = vmatpush1.msra.mxu0 0.0
    %163 = vmatprep.subr.mxu0 0.0
    %164 = vmatpush1.msra.mxu0 0.0
    %165 = vmatprep.subr.mxu0 0.0
    %166 = vmatpush1.msra.mxu0 0.0
    %167 = vmatprep.subr.mxu0 0.0
    %168 = vmatpush1.msra.mxu0 0.0
    %169 = vmatprep.subr.mxu0 0.0
    %170 = vmatpush1.msra.mxu0 0.0
    %171 = vmatprep.subr.mxu0 0.0
    %172 = vmatpush1.msra.mxu0 0.0
    %173 = vmatprep.subr.mxu0 0.0
    %174 = vmatpush1.msra.mxu0 0.0
    %175 = vmatprep.subr.mxu0 0.0
    %176 = vmatpush1.msra.mxu0 0.0
    %177 = vmatprep.subr.mxu0 0.0
    %178 = vmatpush1.msra.mxu0 0.0
    %179 = vmatprep.subr.mxu0 0.0
    %180 = vmatpush1.msra.mxu0 0.0
    %181 = vmatprep.subr.mxu0 0.0
    %182 = vmatpush1.msra.mxu0 0.0
    %183 = vmatprep.subr.mxu0 0.0
    %184 = vmatpush1.msra.mxu0 0.0
    %185 = vmatprep.subr.mxu0 0.0
    %186 = vmatpush1.msra.mxu0 0.0
    %187 = vmatprep.subr.mxu0 0.0
    %188 = vmatpush1.msra.mxu0 0.0
    %189 = vmatprep.subr.mxu0 0.0
    %190 = vmatpush1.msra.mxu0 0.0
    %191 = vmatprep.subr.mxu0 0.0
    %192 = vmatpush1.msra.mxu0 0.0
    %193 = vmatprep.subr.mxu0 0.0
    %194 = vmatpush1.msra.mxu0 0.0
    %195 = vmatprep.subr.mxu0 0.0
    %196 = vmatpush1.msra.mxu0 0.0
    %197 = vmatprep.mubr.f32.mxu0 0.0
    %198 = vmatmul.mubr.f32.gmra.mrb[0].mxu0 %v131
    %v199 = vpop.f32.mrb[0].mxu0
    %v200 = vadd.f32 %v126, %v199
    %v201 = vpop.f32.mrb[0].mxu0
    %202 = vdwg.mxu0
    %vm203 = vcmask 10241
    %v204 = vsel %vm203, %v200, 0.0
    %205 = vadd.xlane.f32.xlu0 %v204
    %v206 = vpop.xlane.xlu0 %205
    %v208 = vrot.slane %v206, 1
    %vm210 = vcmask 1041408
    %v211 = vsel %vm210, %v208, 0.0
    %v212 = vrot.slane %v211, 4
    %v213 = vadd.f32 %v211, %v212
    %v214 = vrot.slane %v213, 2
    %v215 = vadd.f32 %v213, %v214
    %v216 = vrot.slane %v215, 1
    %v217 = vadd.f32 %v215, %v216
    %v218 = vmul.f32 %v217, 0.25
    %v219 = vsub.f32 %v200, %v218
    %v220 = vlaneseq
    %v221 = vshrl.u32 %v220, 7
    %v222 = vsub.s32 0, %v221
    %v223 = vrot.slane %v200, %v222
    %v224 = vadd.f32 %v223, %v219
    %225 = vst.msk [vmem:[%s2 - $0x1] sm:$0x6] %vm203, %v224
    // Predicated region
    $region14: #{dueling_q_forward_packed.1} parent=1 // pred_check
      _
    $region15: #{dueling_q_forward_packed.1} parent=1 // pred_check_branch
      %227 = sbr.rel (0) target = $region17
    $region16: #{dueling_q_forward_packed.1} parent=1 // pred_region
      _
    $region17: #{dueling_q_forward_packed.1} parent=1 // pred_fallthru
      _
    // Predicated region
    $region18: #{dueling_q_forward_packed.1} parent=1 // pred_check
      _
    $region19: #{dueling_q_forward_packed.1} parent=1 // pred_check_branch
      %229 = sbr.rel (0) target = $region21
    $region20: #{dueling_q_forward_packed.1} parent=1 // pred_region
      _
    $region21: #{dueling_q_forward_packed.1} parent=1 // pred_fallthru
      _
    %230 = vsyncpa [#allocation3], 1

</llo_original>
